<compile_context>
chip_gen: v7x
topology: tpu7x:2x2x1
jax: 0.10.0
libtpu: 0.0.40
codegen_flags: <defaults>
</compile_context>

<pallas_src>
import functools
import math

import jax
import jax.numpy as jnp
from jax.experimental import pallas as pl
from jax.experimental.pallas import tpu as pltpu


def _round_up(n, m):
    return ((n + m - 1) // m) * m


def make_sinusoidal_pe(max_len, d_model, dtype=jnp.float32):
    """Same table as the PyTorch module (without the unsqueeze/transpose)."""
    position = jnp.arange(max_len, dtype=jnp.float32)[:, None]            # (L, 1)
    div_term = jnp.exp(
        jnp.arange(0, d_model, 2, dtype=jnp.float32) * (-math.log(10000.0) / d_model)
    )                                                                     # (D/2,)
    pe = jnp.zeros((max_len, d_model), dtype=jnp.float32)
    pe = pe.at[:, 0::2].set(jnp.sin(position * div_term))
    pe = pe.at[:, 1::2].set(jnp.cos(position * div_term))
    return pe.astype(dtype)


def _posenc_kernel(x_ref, pe_ref, o_ref, *, batch):
    # x_ref : (ts, B*D)  lane-dense activations tile
    # pe_ref: (ts, D)    positional-encoding rows for this seq tile
    pe_tile = jnp.tile(pe_ref[...], (1, batch))        # (ts, B*D) broadcast over batch
    o_ref[...] = x_ref[...] + pe_tile


def _posenc_dropout_kernel(x_ref, pe_ref, m_ref, o_ref, *, batch):
    # m_ref: (ts, B*D)  inverted-dropout mask, values in {0, 1/(1-p)}, dtype of x
    pe_tile = jnp.tile(pe_ref[...], (1, batch))
    o_ref[...] = (x_ref[...] + pe_tile) * m_ref[...]


def _sublane_multiple(dtype):
    itemsize = jnp.dtype(dtype).itemsize
    return {4: 8, 2: 16, 1: 32}.get(itemsize, 8)


def positional_encoding_forward(x, pe, *, dropout_p=0.1, training=False, key=None,
                                target_block_bytes=2 * 1024 * 1024, seq_tile=None):
    """x: (S, B, D); pe: (max_len, D) with max_len >= S."""
    S, B, D = x.shape
    max_len, D_pe = pe.shape
    assert D_pe == D and S <= max_len

    dtype = x.dtype
    itemsize = jnp.dtype(dtype).itemsize
    sub = _sublane_multiple(dtype)

    # Cast pe once in the wrapper so the in-kernel add is single-dtype.
    pe_rows = pe[:S].astype(dtype)                      # (S, D)
    x2 = x.reshape(S, B * D)                            # free reshape, lane-dense

    # --- tile sizing: by bytes, dtype-aware sublane rounding, >=2 tiles ---------
    row_bytes = B * D * itemsize
    ts = max(sub, (target_block_bytes // row_bytes) // sub * sub)
    if S > sub:                                         # keep both v7x TCs busy
        ts = min(ts, _round_up(pl.cdiv(S, 2), sub))
    ts = min(ts, _round_up(S, sub))
    if seq_tile is not None:
        ts = min(ts, max(sub, _round_up(seq_tile, sub)))
    grid = (pl.cdiv(S, ts),)

    apply_dropout = bool(training) and dropout_p > 0.0

    x_spec = pl.BlockSpec((ts, B * D), lambda i: (i, 0))
    pe_spec = pl.BlockSpec((ts, D), lambda i: (i, 0))
    out_spec = pl.BlockSpec((ts, B * D), lambda i: (i, 0))

    n_stream = 3 if apply_dropout else 2                # x(+mask) in, out
    flops = (2 if apply_dropout else 1) * S * B * D
    bytes_accessed = ((n_stream * S * B * D) + S * D) * itemsize
    cost = pl.CostEstimate(flops=flops, transcendentals=0,
                           bytes_accessed=bytes_accessed)

    # Explicit VMEM budget: double-buffered streamed blocks + pe block.
    vmem_bytes = 2 * ((n_stream + 1) * ts * B * D + ts * D) * itemsize
    compiler_params = pltpu.CompilerParams(
        dimension_semantics=("parallel",),              # seq tiles are independent
        vmem_limit_bytes=int(min(max(2 * vmem_bytes, 4 << 20), 32 << 20)),
    )

    if apply_dropout:
        if key is None:
            key = jax.random.PRNGKey(0)
        keep = jax.random.bernoulli(key, p=1.0 - float(dropout_p), shape=(S, B * D))
        mask = keep.astype(dtype) * jnp.asarray(1.0 / (1.0 - float(dropout_p)), dtype)
        kernel = functools.partial(_posenc_dropout_kernel, batch=B)
        in_specs = [x_spec, pe_spec, pl.BlockSpec((ts, B * D), lambda i: (i, 0))]
        args = (x2, pe_rows, mask)
    else:
        kernel = functools.partial(_posenc_kernel, batch=B)
        in_specs = [x_spec, pe_spec]
        args = (x2, pe_rows)

    out2 = pl.pallas_call(
        kernel,
        out_shape=jax.ShapeDtypeStruct((S, B * D), dtype),
        grid=grid,
        in_specs=in_specs,
        out_specs=out_spec,
        compiler_params=compiler_params,
        cost_estimate=cost,
    )(*args)

    return out2.reshape(S, B, D)


if __name__ == "__main__":
    d_model, max_len, dropout_p = 32, 500, 0.1
    seq, batch = 64, 4

    key = jax.random.PRNGKey(0)
    k_x, k_drop = jax.random.split(key)
    x = jax.random.normal(k_x, (seq, batch, d_model), dtype=jnp.float32)
    pe = make_sinusoidal_pe(max_len, d_model)

    ref = x + pe[:seq][:, None, :]

    # Eval mode (dropout = identity): multi-tile grid, checked against plain JAX.
    y = positional_encoding_forward(x, pe, dropout_p=dropout_p, training=False)
    jax.block_until_ready(y)
    assert y.shape == x.shape
    assert jnp.allclose(y, ref, atol=1e-6, rtol=1e-6)

    # Training mode: inverted-dropout mask streamed through the kernel.
    y_tr = positional_encoding_forward(x, pe, dropout_p=dropout_p, training=True,
                                       key=k_drop)
    jax.block_until_ready(y_tr)
    assert y_tr.shape == x.shape
    assert bool(jnp.all(jnp.isfinite(y_tr)))
    scale = 1.0 / (1.0 - dropout_p)
    ok = jnp.isclose(y_tr, 0.0, atol=1e-6) | jnp.isclose(y_tr, ref * scale,
                                                         atol=1e-5, rtol=1e-5)
    assert bool(jnp.all(ok))

    print("KERNEL_OK")
</pallas_src>

<mosaic_0001>
module attributes {stable_mosaic.version = 11 : i64} {
  func.func @_posenc_kernel(%arg0: i32, %arg1: memref<32x128xf32, #tpu.memory_space<vmem>>, %arg2: memref<32x32xf32, #tpu.memory_space<vmem>>, %arg3: memref<32x128xf32, #tpu.memory_space<vmem>>) attributes {dimension_semantics = [#tpu.dimension_semantics<parallel>], iteration_bounds = array<i64: 2>, scalar_prefetch = 0 : i64, scratch_operands = 0 : i64, tpu.core_type = #tpu.core_type<tc>, window_params = [{transform_indices = @transform_0, window_bounds = array<i64: 32, 128>}, {transform_indices = @transform_1, window_bounds = array<i64: 32, 32>}, {transform_indices = @transform_2, window_bounds = array<i64: 32, 128>}]} {
    %c0 = arith.constant 0 : index
    %c0_0 = arith.constant 0 : index
    %0 = vector.load %arg2[%c0, %c0_0] : memref<32x32xf32, #tpu.memory_space<vmem>>, vector<32x32xf32>
    %1 = tpu.concatenate %0, %0, %0, %0 in 1 : vector<32x32xf32>, vector<32x32xf32>, vector<32x32xf32>, vector<32x32xf32> -> vector<32x128xf32>
    %c0_1 = arith.constant 0 : index
    %c0_2 = arith.constant 0 : index
    %2 = vector.load %arg1[%c0_1, %c0_2] : memref<32x128xf32, #tpu.memory_space<vmem>>, vector<32x128xf32>
    %3 = arith.addf %2, %1 : vector<32x128xf32>
    %c0_3 = arith.constant 0 : index
    %c0_4 = arith.constant 0 : index
    %4 = vector.load %arg3[%c0_3, %c0_4] : memref<32x128xf32, #tpu.memory_space<vmem>>, vector<32x128xf32>
    tpu.vector_store %arg3[%c0_3, %c0_4], %3 {strides = array<i32>} : memref<32x128xf32, #tpu.memory_space<vmem>>, vector<32x128xf32>,
    return
  }
  func.func @transform_0(%arg0: i32) -> (i32, i32) {
    %c0_i32 = arith.constant 0 : i32
    %c0_i32_0 = arith.constant 0 : i32
    return %arg0, %c0_i32 : i32, i32
  }
  func.func @transform_1(%arg0: i32) -> (i32, i32) {
    %c0_i32 = arith.constant 0 : i32
    %c0_i32_0 = arith.constant 0 : i32
    return %arg0, %c0_i32 : i32, i32
  }
  func.func @transform_2(%arg0: i32) -> (i32, i32) {
    %c0_i32 = arith.constant 0 : i32
    %c0_i32_0 = arith.constant 0 : i32
    return %arg0, %c0_i32 : i32, i32
  }
}

</mosaic_0001>

<llo_original>
// kernel: tpu_custom_call.1
$region0: #{tpu_custom_call.1}
  #allocation0 [shape = 'u32[]', space=smem, size = 0x4, offset = 0x4, fixed_abs, tag = 'smem constant byte address 0x4 - core index']
  #allocation1 [shape = 'u32[144,128]{1,0:T(1,128)}', space=vmem, size = 0x12000, scoped, tag = 'internal scratch']
  %s0 = inlined_call_operand.vmem [shape: f32[64,128], index: 0, kind: input, shape index: {}]
  %s1 = inlined_call_operand.vmem [shape: f32[64,32], index: 1, kind: input, shape index: {}]
  %s2 = inlined_call_operand.hbm [shape: f32[64,128], index: 2, kind: output, shape index: {}]
  %s3 = sld [smem:[#allocation0]]
  $region41: #{tpu_custom_call.1} parent=0
    _
  %s5 = ssub.s32 1, %s3
  %s6 = scalar_select 0, %s5, %s3
  $region1: #{tpu_custom_call.1} parent=0
    #allocation2 [shape = 'u8[32768]{0}', space=vmem, size = 0x8000, scoped, tag = 'output window, operand 0']
    #allocation3 [shape = 's32[2]{0}', space=sflag, size = 0x8, scoped, tag = 'scoped memory for tpu_custom_call.1']
    %7 = vsyncpa [#allocation3], 0
    %s8 = scalar_lea.sflag [#allocation3], 1
    %9 = vsyncpa %s8, 0
    loop: start=0, step=1, limit=4
    $region2: #{tpu_custom_call.1} parent=1 // loop_pre_header
      _
    $region3: #{tpu_custom_call.1} parent=1 // loop_header
      %s11 = sphi 0, %s15
      %p12 = scmp.ge.s32.totalorder %s11, 4
      %s21 = sphi 0, %s23
      %s24 = sphi 0, %s21
      %s25 = sphi 0, %s24
      %s41 = sphi 0, %s25
      %s47 = sphi 0, %s49
      %s50 = sphi 0, %s47
      %s51 = sphi 0, %s50
      %s67 = sphi 0, %s51
      %s73 = sphi 0, %s75
      %s76 = sphi 0, %s73
      %s77 = sphi 0, %s76
      %s93 = sphi 0, %s77
    $region4: #{tpu_custom_call.1} parent=1 // loop_header_branch
      %14 = sbr.rel (%p12) target = $region8
    $region5: #{tpu_custom_call.1} parent=1 // loop_body
      %s16 = ssub.s32 %s11, 1
      %s17 = ssub.s32 %s11, 2
      %s18 = sadd.s32 %s11, 1
      %s19 = ssub.s32 %s11, %s18
      %p20 = scmp.eq.s32.totalorder %s19, 0
      %s22 = sadd.s32 %s21, 1
      %s23 = scalar_select %p20, %s21, %s22
      %p26 = pneg %p20
      %p27 = scmp.eq.s32.totalorder %s11, 1
      %p28 = por %p26, %p27
      %p29 = scmp.ne.s32.totalorder %s21, %s24
      %p30 = scmp.eq.s32.totalorder %s11, 0
      %p31 = por %p29, %p30
      %p32 = scmp.ne.s32.totalorder %s21, %s24
      %p33 = scmp.eq.s32.totalorder %s16, 1
      %p34 = por %p32, %p33
      %p35 = scmp.ne.s32.totalorder %s24, %s25
      %p36 = scmp.eq.s32.totalorder %s16, 0
      %p37 = por %p35, %p36
      %p38 = scmp.ne.s32.totalorder %s24, %s25
      %p39 = scmp.eq.s32.totalorder %s17, 1
      %p40 = por %p38, %p39
      %p42 = scmp.ne.s32.totalorder %s25, %s41
      %p43 = scmp.eq.s32.totalorder %s17, 0
      %p44 = por %p42, %p43
      %s45 = ssub.s32 %s11, %s18
      %p46 = scmp.eq.s32.totalorder %s45, 0
      %s48 = sadd.s32 %s47, 1
      %s49 = scalar_select %p46, %s47, %s48
      %p52 = pneg %p46
      %p53 = scmp.eq.s32.totalorder %s11, 1
      %p54 = por %p52, %p53
      %p55 = scmp.ne.s32.totalorder %s47, %s50
      %p56 = scmp.eq.s32.totalorder %s11, 0
      %p57 = por %p55, %p56
      %p58 = scmp.ne.s32.totalorder %s47, %s50
      %p59 = scmp.eq.s32.totalorder %s16, 1
      %p60 = por %p58, %p59
      %p61 = scmp.ne.s32.totalorder %s50, %s51
      %p62 = scmp.eq.s32.totalorder %s16, 0
      %p63 = por %p61, %p62
      %p64 = scmp.ne.s32.totalorder %s50, %s51
      %p65 = scmp.eq.s32.totalorder %s17, 1
      %p66 = por %p64, %p65
      %p68 = scmp.ne.s32.totalorder %s51, %s67
      %p69 = scmp.eq.s32.totalorder %s17, 0
      %p70 = por %p68, %p69
      %s71 = ssub.s32 %s11, %s18
      %p72 = scmp.eq.s32.totalorder %s71, 0
      %s74 = sadd.s32 %s73, 1
      %s75 = scalar_select %p72, %s73, %s74
      %p78 = pneg %p72
      %p79 = scmp.eq.s32.totalorder %s11, 1
      %p80 = por %p78, %p79
      %p81 = scmp.ne.s32.totalorder %s73, %s76
      %p82 = scmp.eq.s32.totalorder %s11, 0
      %p83 = por %p81, %p82
      %p84 = scmp.ne.s32.totalorder %s73, %s76
      %p85 = scmp.eq.s32.totalorder %s16, 1
      %p86 = por %p84, %p85
      %p87 = scmp.ne.s32.totalorder %s76, %s77
      %p88 = scmp.eq.s32.totalorder %s16, 0
      %p89 = por %p87, %p88
      %p90 = scmp.ne.s32.totalorder %s76, %s77
      %p91 = scmp.eq.s32.totalorder %s17, 1
      %p92 = por %p90, %p91
      %p94 = scmp.ne.s32.totalorder %s77, %s93
      %p95 = scmp.eq.s32.totalorder %s17, 0
      %p96 = por %p94, %p95
      %p97 = scmp.le.s32.totalorder 1, %s11
      %p98 = scmp.lt.s32.totalorder %s11, 3
      %p99 = pnand %p97, %p98
      %p100 = pneg %p99
      // Predicated region
      $region9: #{tpu_custom_call.1} parent=5 // pred_check
        _
      $region10: #{tpu_custom_call.1} parent=5 // pred_check_branch
        %102 = sbr.rel (%p99) target = $region12
      $region11: #{tpu_custom_call.1} parent=5 // pred_region
        %s103 = ssub.s32 %s11, 1
      $region12: #{tpu_custom_call.1} parent=5 // pred_fallthru
        _
      %p104 = scmp.lt.s32.totalorder %s11, 2
      // Predicated region
      $region13: #{tpu_custom_call.1} parent=5 // pred_check
        %p105 = pneg %p104
      $region14: #{tpu_custom_call.1} parent=5 // pred_check_branch
        %107 = sbr.rel (%p105) target = $region16
      $region15: #{tpu_custom_call.1} parent=5 // pred_region
        // Predicated region
        $region17: #{tpu_custom_call.1} parent=15 // pred_check
          %p108 = pneg %p31
        $region18: #{tpu_custom_call.1} parent=15 // pred_check_branch
          %110 = sbr.rel (%p108) target = $region20
        $region19: #{tpu_custom_call.1} parent=15 // pred_region
          %s111 = smul.u32 4, %s11
          %p112 = scmp.lt.s32.totalorder %s111, 7
          %s113 = scalar_select %p112, %s111, 7
          %s114 = smul.addr %s113, 8
          %s115 = scalar_lea.vmem %s0, %s114
          %s116 = smul.u32 4, %s11
        $region20: #{tpu_custom_call.1} parent=15 // pred_fallthru
          _
        // Predicated region
        $region21: #{tpu_custom_call.1} parent=15 // pred_check
          %p117 = pneg %p57
        $region22: #{tpu_custom_call.1} parent=15 // pred_check_branch
          %119 = sbr.rel (%p117) target = $region24
        $region23: #{tpu_custom_call.1} parent=15 // pred_region
          %s120 = smul.u32 4, %s11
          %p121 = scmp.lt.s32.totalorder %s120, 7
          %s122 = scalar_select %p121, %s120, 7
          %s123 = smul.addr %s122, 8
          %s124 = scalar_lea.vmem %s1, %s123
          %s125 = smul.u32 4, %s11
        $region24: #{tpu_custom_call.1} parent=15 // pred_fallthru
          _
      $region16: #{tpu_custom_call.1} parent=5 // pred_fallthru
        _
      %p126 = scmp.le.s32.totalorder 1, %s11
      %p127 = scmp.lt.s32.totalorder %s11, 3
      %p128 = pnand %p126, %p127
      %p129 = pneg %p128
      // Predicated region
      $region25: #{tpu_custom_call.1} parent=5 // pred_check
        _
      $region26: #{tpu_custom_call.1} parent=5 // pred_check_branch
        %131 = sbr.rel (%p128) target = $region28
      $region27: #{tpu_custom_call.1} parent=5 // pred_region
        %s132 = ssub.s32 %s11, 1
        %s133 = smul.u32 4, %s16
        %p134 = scmp.lt.s32.totalorder %s133, 7
        %s135 = scalar_select %p134, %s133, 7
        %s136 = smul.addr %s135, 8
        %s137 = scalar_lea.vmem %s0, %s136
        %p138 = pneg %p37
        %p139 = pneg %p34
        %s140 = smul.u32 4, %s16
        %p141 = scmp.lt.s32.totalorder %s140, 7
        %s142 = scalar_select %p141, %s140, 7
        %s143 = smul.addr %s142, 8
        %s144 = scalar_lea.vmem %s1, %s143
        %p145 = pneg %p63
        %p146 = pneg %p60
        %p147 = pneg %p89
        %p148 = pneg %p86
        %s149 = sand.u32 %s76, 1
        %s150 = scalar_lea.sflag [#allocation3], %s149
        %s151 = sand.u32 %s76, 1
        %s152 = smul.addr %s151, 32
        %s153 = scalar_lea.vmem [#allocation2], %s152
        %s154 = smul.u32 4, %s16
        %p155 = scmp.lt.s32.totalorder %s154, 7
        %s156 = scalar_select %p155, %s154, 7
        %s157 = smul.addr %s156, 8
        %s158 = scalar_lea.vmem %s0, %s157
        %s159 = smul.u32 4, %s16
        %s160 = smul.u32 4, %s16
        %p161 = scmp.lt.s32.totalorder %s160, 7
        %s162 = scalar_select %p161, %s160, 7
        %s163 = smul.addr %s162, 8
        %s164 = scalar_lea.vmem %s1, %s163
        %s165 = smul.u32 4, %s16
        %s166 = smul.u32 4, %s16
        %v167 = vld [vmem:[%s164] sm:$0xff]
        %v168 = vld [vmem:[%s164 + $0x8] sm:$0xff]
        %v169 = vld [vmem:[%s164 + $0x10] sm:$0xff]
        %v170 = vld [vmem:[%s164 + $0x18] sm:$0xff]
        %175 = vrot.lane.b32.xlu0 %v167, 32
        %v176 = vpop.permute.xlu0 %175
        %177 = vrot.lane.b32.xlu0 %v168, 32
        %v178 = vpop.permute.xlu0 %177
        %179 = vrot.lane.b32.xlu0 %v169, 32
        %v180 = vpop.permute.xlu0 %179
        %181 = vrot.lane.b32.xlu0 %v170, 32
        %v182 = vpop.permute.xlu0 %181
        %187 = vrot.lane.b32.xlu0 %v167, 64
        %v188 = vpop.permute.xlu0 %187
        %189 = vrot.lane.b32.xlu0 %v168, 64
        %v190 = vpop.permute.xlu0 %189
        %191 = vrot.lane.b32.xlu0 %v169, 64
        %v192 = vpop.permute.xlu0 %191
        %193 = vrot.lane.b32.xlu0 %v170, 64
        %v194 = vpop.permute.xlu0 %193
        %199 = vrot.lane.b32.xlu0 %v167, 96
        %v200 = vpop.permute.xlu0 %199
        %201 = vrot.lane.b32.xlu0 %v168, 96
        %v202 = vpop.permute.xlu0 %201
        %203 = vrot.lane.b32.xlu0 %v169, 96
        %v204 = vpop.permute.xlu0 %203
        %205 = vrot.lane.b32.xlu0 %v170, 96
        %v206 = vpop.permute.xlu0 %205
        %vm211 = vcmask 261120
        %v212 = vsel %vm211, %v167, %v176
        %v213 = vsel %vm211, %v168, %v178
        %v214 = vsel %vm211, %v169, %v180
        %v215 = vsel %vm211, %v170, %v182
        %vm216 = vcmask 523264
        %v217 = vsel %vm216, %v212, %v188
        %v218 = vsel %vm216, %v213, %v190
        %v219 = vsel %vm216, %v214, %v192
        %v220 = vsel %vm216, %v215, %v194
        %vm221 = vcmask 785408
        %v222 = vsel %vm221, %v217, %v200
        %v223 = vsel %vm221, %v218, %v202
        %v224 = vsel %vm221, %v219, %v204
        %v225 = vsel %vm221, %v220, %v206
        %v226 = vld [vmem:[%s158] sm:$0xff]
        %v227 = vld [vmem:[%s158 + $0x8] sm:$0xff]
        %v228 = vld [vmem:[%s158 + $0x10] sm:$0xff]
        %v229 = vld [vmem:[%s158 + $0x18] sm:$0xff]
        %v230 = vadd.f32 %v226, %v222
        %v231 = vadd.f32 %v227, %v223
        %v232 = vadd.f32 %v228, %v224
        %v233 = vadd.f32 %v229, %v225
        %234 = vst [vmem:[%s153] sm:$0xff] %v230
        %235 = vst [vmem:[%s153 + $0x8] sm:$0xff] %v231
        %236 = vst [vmem:[%s153 + $0x10] sm:$0xff] %v232
        %237 = vst [vmem:[%s153 + $0x18] sm:$0xff] %v233
        %s238 = sand.u32 %s76, 1
        %s239 = scalar_lea.sflag [#allocation3], %s238
        %s240 = sand.u32 %s76, 1
        %s241 = smul.addr %s240, 32
        %s242 = scalar_lea.vmem [#allocation2], %s241
        // Predicated region
        $region29: #{tpu_custom_call.1} parent=27 // pred_check
          %p243 = pneg %p86
        $region30: #{tpu_custom_call.1} parent=27 // pred_check_branch
          %245 = sbr.rel (%p243) target = $region32
        $region31: #{tpu_custom_call.1} parent=27 // pred_region
          %s246 = smul.u32 4, %s16
          %s248 = ssub.s32 512, 512
          %249 = vsyncadd %s239, %s248
          %s250 = smul.addr %s246, 128
          %s251 = scalar_lea.hbm %s2, %s250
          %s252 = sshll.u32 %s242, 4
          %s253 = int_to_ptr.vmem [resolvable:$true] %s252
          %258 = dma.vmem_to_hbm [thread:$0]  %s253, 512, %s251, %s239, 128, 128, 8
        $region32: #{tpu_custom_call.1} parent=27 // pred_fallthru
          _
      $region28: #{tpu_custom_call.1} parent=5 // pred_fallthru
        _
      %p259 = scmp.le.s32.totalorder 2, %s11
      // Predicated region
      $region33: #{tpu_custom_call.1} parent=5 // pred_check
        %p260 = pneg %p259
      $region34: #{tpu_custom_call.1} parent=5 // pred_check_branch
        %262 = sbr.rel (%p260) target = $region36
      $region35: #{tpu_custom_call.1} parent=5 // pred_region
        %s263 = ssub.s32 %s11, 2
        // Predicated region
        $region37: #{tpu_custom_call.1} parent=35 // pred_check
          %p264 = pneg %p92
        $region38: #{tpu_custom_call.1} parent=35 // pred_check_branch
          %266 = sbr.rel (%p264) target = $region40
        $region39: #{tpu_custom_call.1} parent=35 // pred_region
          %s267 = sand.u32 %s77, 1
          %s268 = scalar_lea.sflag [#allocation3], %s267
          %s269 = sand.u32 %s77, 1
          %s270 = smul.addr %s269, 32
          %s271 = scalar_lea.vmem [#allocation2], %s270
          %272 = dma.done %s268, 512
        $region40: #{tpu_custom_call.1} parent=35 // pred_fallthru
          _
      $region36: #{tpu_custom_call.1} parent=5 // pred_fallthru
        _
    $region6: #{tpu_custom_call.1} parent=1 // loop_footer
      %s15 = sadd.s32 1, %s11
    $region7: #{tpu_custom_call.1} parent=1 // loop_footer_branch
      %10 = sbr.rel target = $region3
    $region8: #{tpu_custom_call.1} parent=1 // loop_exit
      _
    %273 = vsyncpa [#allocation3], 1
    %s274 = scalar_lea.sflag [#allocation3], 1
    %275 = vsyncpa %s274, 1

</llo_original>
